<compile_context>
chip_gen: v7x
topology: tpu7x:2x2x1
jax: 0.10.0
libtpu: 0.0.40
codegen_flags: <defaults>
</compile_context>

<pallas_src>
import functools

import jax
import jax.numpy as jnp
from jax.experimental import pallas as pl
from jax.experimental.pallas import tpu as pltpu


COMPUTE_DTYPE = jnp.bfloat16   # all streamed operands; accumulation stays f32
LANE = 128                     # feature dims padded to lane multiples
TILE_M = 512                   # dst-row tile (output rows)
TILE_K = 512                   # src-col tile (reduction axis of A@X)
MIN_SPLIT_M = 256              # only force a 2-way dst split above this size


def _round_up(x, m):
    return -(-x // m) * m


def _tile_and_pad(n, max_tile, align, prefer_split=False):
    """Tile size (multiple of `align`, <= max_tile) and padded extent.

    With prefer_split=True, forces >= 2 dst tiles when the node count allows a
    reasonably sized split, so the 'parallel' grid axis can feed both v7x cores.
    """
    n_min = _round_up(n, align)
    t = min(max_tile, n_min)
    if prefer_split and n_min // t < 2 and n_min >= 2 * MIN_SPLIT_M:
        t = _round_up((n_min + 1) // 2, align)
    return t, _round_up(n, t)


def _vmem_limit(*tile_bytes):
    """Scoped-VMEM request: double-buffered streams + headroom, clamped so the
    request is valid on every generation (v7x has 64 MiB physical per TC)."""
    need = 2 * sum(int(b) for b in tile_bytes) + (4 << 20)
    return int(min(max(need, 32 << 20), 48 << 20))


# ---------------------------------------------------------------------------
# Kernel A (xw_first, Fout < Fin): out[im] += sum_{r,ks} adj[r,im,ks] @ XW[r,ks]
# X@W is precomputed outside (it does not depend on the dst tile).
# ---------------------------------------------------------------------------
def _rgcn_axw_kernel(adj_ref, xw_ref, bsum_ref, out_ref, *, apply_relu):
    r = pl.program_id(1)
    ks = pl.program_id(2)
    nr = pl.num_programs(1)
    nk = pl.num_programs(2)

    part = jnp.dot(adj_ref[0], xw_ref[0], preferred_element_type=jnp.float32)

    @pl.when((r == 0) & (ks == 0))
    def _():
        out_ref[...] = part            # direct write: no zero-init + RMW on step 0

    @pl.when((r > 0) | (ks > 0))
    def _():
        out_ref[...] += part

    @pl.when((r == nr - 1) & (ks == nk - 1))
    def _():
        res = out_ref[...] + bsum_ref[...]     # single add of sum_r(b_r)
        if apply_relu:                         # fuse inter-layer ReLU
            res = jnp.maximum(res, 0.0)
        out_ref[...] = res


# ---------------------------------------------------------------------------
# Kernel B (Fin <= Fout): agg = sum_ks adj[r,im,ks] @ X[src(r),ks]  (f32 scratch)
#                         out[im] += agg @ W[r]   (once per (im, r))
# ---------------------------------------------------------------------------
def _rgcn_ax_kernel(sidx_ref, adj_ref, x_ref, w_ref, bsum_ref, out_ref, agg_ref,
                    *, apply_relu):
    del sidx_ref  # only consumed by the index_maps (scalar prefetch)
    r = pl.program_id(1)
    ks = pl.program_id(2)
    nr = pl.num_programs(1)
    nk = pl.num_programs(2)

    aggp = jnp.dot(adj_ref[0], x_ref[0], preferred_element_type=jnp.float32)

    @pl.when((r == 0) & (ks == 0))
    def _():
        out_ref[...] = jnp.zeros_like(out_ref)

    @pl.when(ks == 0)
    def _():
        agg_ref[...] = aggp

    @pl.when(ks > 0)
    def _():
        agg_ref[...] += aggp

    @pl.when(ks == nk - 1)
    def _():
        out_ref[...] += jnp.dot(agg_ref[...].astype(COMPUTE_DTYPE), w_ref[0],
                                preferred_element_type=jnp.float32)

    @pl.when((r == nr - 1) & (ks == nk - 1))
    def _():
        res = out_ref[...] + bsum_ref[...]
        if apply_relu:
            res = jnp.maximum(res, 0.0)
        out_ref[...] = res


# ---------------------------------------------------------------------------
# pallas_call builders
# ---------------------------------------------------------------------------
def _rgcn_dsttype_axw_pallas(adj_stack, xw_stack, b_sum, tm, tk, apply_relu):
    """adj_stack: (R, Nd_p, Ns_p) bf16 (norms folded); xw_stack: (R, Ns_p, Fout_p)
    bf16; b_sum: (1, Fout_p) f32 -> (Nd_p, Fout_p) f32."""
    R, Nd_p, Ns_p = adj_stack.shape
    Fout_p = xw_stack.shape[-1]
    kernel = functools.partial(_rgcn_axw_kernel, apply_relu=apply_relu)
    vmem = _vmem_limit(tm * tk * 2, tk * Fout_p * 2, Fout_p * 4, tm * Fout_p * 4)
    return pl.pallas_call(
        kernel,
        out_shape=jax.ShapeDtypeStruct((Nd_p, Fout_p), jnp.float32),
        grid_spec=pltpu.PrefetchScalarGridSpec(
            num_scalar_prefetch=0,
            grid=(Nd_p // tm, R, Ns_p // tk),
            in_specs=[
                pl.BlockSpec((1, tm, tk), lambda im, r, ks: (r, im, ks)),
                pl.BlockSpec((1, tk, Fout_p), lambda im, r, ks: (r, ks, 0)),
                pl.BlockSpec((1, Fout_p), lambda im, r, ks: (0, 0)),
            ],
            out_specs=pl.BlockSpec((tm, Fout_p), lambda im, r, ks: (im, 0)),
        ),
        compiler_params=pltpu.CompilerParams(
            dimension_semantics=("parallel", "arbitrary", "arbitrary"),
            vmem_limit_bytes=vmem),
    )(adj_stack, xw_stack, b_sum)


def _rgcn_dsttype_ax_pallas(src_idx, adj_stack, x_all, w_stack, b_sum, tm, tk,
                            apply_relu):
    """adj_stack: (R, Nd_p, Ns_p) bf16; x_all: (S, Ns_p, Fin_p) bf16 (one slab per
    src node type, selected via scalar-prefetched src_idx); w_stack: (R, Fin_p,
    Fout_p) bf16; b_sum: (1, Fout_p) f32 -> (Nd_p, Fout_p) f32."""
    R, Nd_p, Ns_p = adj_stack.shape
    Fin_p = x_all.shape[-1]
    Fout_p = w_stack.shape[-1]
    kernel = functools.partial(_rgcn_ax_kernel, apply_relu=apply_relu)
    vmem = _vmem_limit(tm * tk * 2, tk * Fin_p * 2, Fin_p * Fout_p * 2,
                       Fout_p * 4, tm * Fout_p * 4, tm * Fin_p * 4)
    return pl.pallas_call(
        kernel,
        out_shape=jax.ShapeDtypeStruct((Nd_p, Fout_p), jnp.float32),
        grid_spec=pltpu.PrefetchScalarGridSpec(
            num_scalar_prefetch=1,                    # src-type index per relation
            grid=(Nd_p // tm, R, Ns_p // tk),
            in_specs=[
                pl.BlockSpec((1, tm, tk), lambda im, r, ks, sidx: (r, im, ks)),
                pl.BlockSpec((1, tk, Fin_p), lambda im, r, ks, sidx: (sidx[r], ks, 0)),
                pl.BlockSpec((1, Fin_p, Fout_p), lambda im, r, ks, sidx: (r, 0, 0)),
                pl.BlockSpec((1, Fout_p), lambda im, r, ks, sidx: (0, 0)),
            ],
            out_specs=pl.BlockSpec((tm, Fout_p), lambda im, r, ks, sidx: (im, 0)),
            scratch_shapes=[pltpu.VMEM((tm, Fin_p), jnp.float32)],  # only this path
        ),
        compiler_params=pltpu.CompilerParams(
            dimension_semantics=("parallel", "arbitrary", "arbitrary"),
            vmem_limit_bytes=vmem),
    )(src_idx, adj_stack, x_all, w_stack, b_sum)


# ---------------------------------------------------------------------------
# Hetero graph plumbing (plain JAX glue).
# ---------------------------------------------------------------------------
def prepare_graph(relations, adj, node_counts):
    """Per dst node type: padded, degree-normalized bf16 adjacency stack (shared by
    both layers), src-type indices and tiling."""
    meta = {}
    dst_types = []
    for (_, _, d) in relations:
        if d not in dst_types:
            dst_types.append(d)

    for d in dst_types:
        rels = [(s, r) for (s, r, dd) in relations if dd == d]
        src_types = []
        for (s, _) in rels:
            if s not in src_types:
                src_types.append(s)
        src_idx = jnp.asarray([src_types.index(s) for (s, _) in rels], jnp.int32)

        n_dst = node_counts[d]
        n_src = max(node_counts[s] for s in src_types)
        tm, nd_p = _tile_and_pad(n_dst, TILE_M, 16, prefer_split=True)  # 16: bf16 sublanes
        tk, ns_p = _tile_and_pad(n_src, TILE_K, LANE)

        a = jnp.stack([
            jnp.pad(adj[r].astype(jnp.float32),
                    ((0, nd_p - adj[r].shape[0]), (0, ns_p - adj[r].shape[1])))
            for (_, r) in rels])                                        # (R, Nd_p, Ns_p)

        # DGL GraphConv norm='both' (degrees clamped to >= 1), folded straight into
        # the adjacency: one pre-normalized bf16 operand, no per-step norm streams.
        # Zero padding leaves the real degrees untouched.
        nsrc = jax.lax.rsqrt(jnp.maximum(jnp.sum(a, axis=1), 1.0))     # (R, Ns_p)
        ndst = jax.lax.rsqrt(jnp.maximum(jnp.sum(a, axis=2), 1.0))     # (R, Nd_p)
        a_hat = (a * nsrc[:, None, :] * ndst[:, :, None]).astype(COMPUTE_DTYPE)

        meta[d] = dict(rels=rels, src_types=src_types, src_idx=src_idx,
                       adj=a_hat, n_dst=n_dst, tm=tm, tk=tk, nd_p=nd_p, ns_p=ns_p)
    return meta


def rgcn_hetero_layer(meta, feats, weights, biases, in_feats, out_feats, apply_relu):
    """One HeteroGraphConv({rel: GraphConv}, aggregate='sum') layer."""
    fin_p = _round_up(in_feats, LANE)
    fout_p = _round_up(out_feats, LANE)
    xw_first = out_feats < in_feats
    out = {}
    for d, m in meta.items():
        b_sum = jnp.pad(sum(biases[r] for (_, r) in m["rels"]),
                        (0, fout_p - out_feats)).astype(jnp.float32)[None, :]

        if xw_first:
            # Hoist X@W out of the kernel (depends only on (r, ks), not the dst tile):
            # computed once by XLA in f32 accumulate, streamed to the kernel as bf16.
            xw = jnp.stack([
                jnp.dot(
                    jnp.pad(feats[s], ((0, m["ns_p"] - feats[s].shape[0]),
                                       (0, fin_p - feats[s].shape[1]))
                            ).astype(COMPUTE_DTYPE),
                    jnp.pad(weights[r], ((0, fin_p - in_feats),
                                         (0, fout_p - out_feats))
                            ).astype(COMPUTE_DTYPE),
                    preferred_element_type=jnp.float32).astype(COMPUTE_DTYPE)
                for (s, r) in m["rels"]])                               # (R, Ns_p, Fout_p)
            y = _rgcn_dsttype_axw_pallas(m["adj"], xw, b_sum, m["tm"], m["tk"],
                                         apply_relu)
        else:
            # One bf16 feature slab per *src node type*; per-relation bf16 weights.
            x_all = jnp.stack([
                jnp.pad(feats[s], ((0, m["ns_p"] - feats[s].shape[0]),
                                   (0, fin_p - feats[s].shape[1]))
                        ).astype(COMPUTE_DTYPE)
                for s in m["src_types"]])                               # (S, Ns_p, Fin_p)
            w = jnp.stack([
                jnp.pad(weights[r], ((0, fin_p - in_feats),
                                     (0, fout_p - out_feats))
                        ).astype(COMPUTE_DTYPE)
                for (_, r) in m["rels"]])                               # (R, Fin_p, Fout_p)
            y = _rgcn_dsttype_ax_pallas(m["src_idx"], m["adj"], x_all, w, b_sum,
                                        m["tm"], m["tk"], apply_relu)
        out[d] = y[: m["n_dst"]]   # drop padded dst rows; keep lane-padded feature cols
    return out


def rgcn_forward(relations, adj, inputs, params):
    node_counts = {t: x.shape[0] for t, x in inputs.items()}
    meta = prepare_graph(relations, adj, node_counts)

    any_rel = next(iter(params["w1"]))
    in_f, hid_f = params["w1"][any_rel].shape
    out_f = params["w2"][any_rel].shape[1]

    # conv1 -> ReLU (fused into layer-1 kernel) -> conv2
    h = rgcn_hetero_layer(meta, inputs, params["w1"], params["b1"],
                          in_f, hid_f, apply_relu=True)
    h = rgcn_hetero_layer(meta, h, params["w2"], params["b2"],
                          hid_f, out_f, apply_relu=False)
    return {k: v[:, :out_f] for k, v in h.items()}   # strip lane padding


# ---------------------------------------------------------------------------
# Pure-JAX f32 reference (same math as DGL GraphConv norm='both' + sum aggregation)
# ---------------------------------------------------------------------------
def _graphconv_ref(A, X, W, b):
    norm_s = jax.lax.rsqrt(jnp.maximum(jnp.sum(A, axis=0, keepdims=True), 1.0))
    norm_d = jax.lax.rsqrt(jnp.maximum(jnp.sum(A, axis=1, keepdims=True), 1.0))
    return ((A * norm_s) @ X * norm_d) @ W + b[None, :]


def rgcn_forward_ref(relations, adj, inputs, params):
    def layer(feats, w, b):
        out = {}
        for (s, r, d) in relations:
            y = _graphconv_ref(adj[r], feats[s], w[r], b[r])
            out[d] = out.get(d, 0.0) + y
        return out

    h = layer(inputs, params["w1"], params["b1"])
    h = {k: jnp.maximum(v, 0.0) for k, v in h.items()}
    return layer(h, params["w2"], params["b2"])


# ---------------------------------------------------------------------------
if __name__ == "__main__":
    key = jax.random.PRNGKey(0)

    # Synthetic heterograph: 2 node types, 3 relation types.
    N = 16                                   # nodes per node type
    in_feats, hid_feats, out_feats = 8, 16, 8
    relations = [                            # (src_type, rel_name, dst_type)
        ("user", "follows", "user"),
        ("user", "plays", "item"),
        ("item", "played-by", "user"),
    ]
    rel_names = [r for (_, r, _) in relations]

    keys = jax.random.split(key, 16)

    # Dense 0/1 adjacency per relation: (N_dst, N_src)
    adj = {
        "follows": jax.random.bernoulli(keys[0], 0.3, (N, N)).astype(jnp.float32),
        "plays": jax.random.bernoulli(keys[1], 0.3, (N, N)).astype(jnp.float32),
        "played-by": jax.random.bernoulli(keys[2], 0.3, (N, N)).astype(jnp.float32),
    }

    # Node features per node type: (N, in_feats)
    inputs = {
        "user": jax.random.normal(keys[3], (N, in_feats), jnp.float32),
        "item": jax.random.normal(keys[4], (N, in_feats), jnp.float32),
    }

    # GraphConv parameters: one (W, b) per relation per layer (HeteroGraphConv).
    def glorot(k, fan_in, fan_out):
        lim = (6.0 / (fan_in + fan_out)) ** 0.5
        return jax.random.uniform(k, (fan_in, fan_out), jnp.float32, -lim, lim)

    wkeys = jax.random.split(keys[5], 2 * len(rel_names))
    bkeys = jax.random.split(keys[6], 2 * len(rel_names))
    params = {
        "w1": {r: glorot(wkeys[i], in_feats, hid_feats) for i, r in enumerate(rel_names)},
        "b1": {r: 0.1 * jax.random.normal(bkeys[i], (hid_feats,), jnp.float32)
               for i, r in enumerate(rel_names)},
        "w2": {r: glorot(wkeys[len(rel_names) + i], hid_feats, out_feats)
               for i, r in enumerate(rel_names)},
        "b2": {r: 0.1 * jax.random.normal(bkeys[len(rel_names) + i], (out_feats,),
                                          jnp.float32)
               for i, r in enumerate(rel_names)},
    }

    out = rgcn_forward(relations, adj, inputs, params)
    out = {k: jax.block_until_ready(v) for k, v in out.items()}

    ref = rgcn_forward_ref(relations, adj, inputs, params)
    for k in out:
        assert out[k].shape == (N, out_feats), (k, out[k].shape)
        err = float(jnp.max(jnp.abs(out[k] - ref[k])))
        scale = float(jnp.max(jnp.abs(ref[k]))) + 1e-6
        # bf16 operands everywhere (norm-folded adjacency, X, W, hoisted XW) with f32
        # accumulation: ~1% typical / 4% worst-case relative error budget.
        assert err <= 4e-2 * scale + 1e-3, (k, err, scale)

    print("KERNEL_OK")
</pallas_src>

<mosaic_0001>
module attributes {stable_mosaic.version = 11 : i64} {
  func.func @_rgcn_ax_kernel(%arg0: i32, %arg1: i32, %arg2: i32, %arg3: memref<2xi32, #tpu.memory_space<smem>>, %arg4: memref<1x16x128xbf16, #tpu.memory_space<vmem>>, %arg5: memref<1x128x128xbf16, #tpu.memory_space<vmem>>, %arg6: memref<1x128x128xbf16, #tpu.memory_space<vmem>>, %arg7: memref<1x128xf32, #tpu.memory_space<vmem>>, %arg8: memref<16x128xf32, #tpu.memory_space<vmem>>, %arg9: memref<16x128xf32, #tpu.memory_space<vmem>>) attributes {dimension_semantics = [#tpu.dimension_semantics<parallel>, #tpu.dimension_semantics<arbitrary>, #tpu.dimension_semantics<arbitrary>], iteration_bounds = array<i64: 1, 2, 1>, scalar_prefetch = 1 : i64, scratch_operands = 1 : i64, tpu.core_type = #tpu.core_type<tc>, window_params = [{transform_indices = @transform_0, window_bounds = array<i64: 1, 16, 128>}, {transform_indices = @transform_1, window_bounds = array<i64: 1, 128, 128>}, {transform_indices = @transform_2, window_bounds = array<i64: 1, 128, 128>}, {pipeline_mode = #tpu.pipeline_mode<synchronous>, transform_indices = @transform_3, window_bounds = array<i64: 1, 128>}, {transform_indices = @transform_4, window_bounds = array<i64: 16, 128>}]} {
    %c0 = arith.constant 0 : index
    %c0_0 = arith.constant 0 : index
    %c0_1 = arith.constant 0 : index
    %0 = vector.load %arg4[%c0, %c0_0, %c0_1] : memref<1x16x128xbf16, #tpu.memory_space<vmem>>, vector<1x16x128xbf16>
    %1 = vector.shape_cast %0 : vector<1x16x128xbf16> to vector<16x128xbf16>
    %c0_2 = arith.constant 0 : index
    %c0_3 = arith.constant 0 : index
    %c0_4 = arith.constant 0 : index
    %2 = vector.load %arg5[%c0_2, %c0_3, %c0_4] : memref<1x128x128xbf16, #tpu.memory_space<vmem>>, vector<1x128x128xbf16>
    %3 = vector.shape_cast %2 : vector<1x128x128xbf16> to vector<128x128xbf16>
    %cst = arith.constant dense<0.000000e+00> : vector<16x128xf32>
    %4 = tpu.matmul %1, %3, %cst {dimension_numbers = #tpu.dot_dimension_numbers<[1], [0], [0], [1], [0, 0, 1, 1], [], []>} : vector<16x128xbf16>, vector<128x128xbf16>, vector<16x128xf32> -> vector<16x128xf32>
    %c0_i32 = arith.constant 0 : i32
    %5 = arith.cmpi eq, %arg1, %c0_i32 : i32
    %c0_i32_5 = arith.constant 0 : i32
    %6 = arith.cmpi eq, %arg2, %c0_i32_5 : i32
    %7 = arith.andi %5, %6 : i1
    %8 = arith.extui %7 : i1 to i32
    %c0_i32_6 = arith.constant 0 : i32
    %9 = arith.cmpi ne, %8, %c0_i32_6 : i32
    scf.if %9 {
      %cst_15 = arith.constant 0.000000e+00 : f32
      %24 = vector.broadcast %cst_15 : f32 to vector<16x128xf32>
      %c0_16 = arith.constant 0 : index
      %c0_17 = arith.constant 0 : index
      %25 = vector.load %arg8[%c0_16, %c0_17] : memref<16x128xf32, #tpu.memory_space<vmem>>, vector<16x128xf32>
      tpu.vector_store %arg8[%c0_16, %c0_17], %24 {strides = array<i32>} : memref<16x128xf32, #tpu.memory_space<vmem>>, vector<16x128xf32>,
    } else {
    }
    %c0_i32_7 = arith.constant 0 : i32
    %10 = arith.cmpi eq, %arg2, %c0_i32_7 : i32
    %11 = arith.extui %10 : i1 to i32
    %c0_i32_8 = arith.constant 0 : i32
    %12 = arith.cmpi ne, %11, %c0_i32_8 : i32
    scf.if %12 {
      %c0_15 = arith.constant 0 : index
      %c0_16 = arith.constant 0 : index
      %24 = vector.load %arg9[%c0_15, %c0_16] : memref<16x128xf32, #tpu.memory_space<vmem>>, vector<16x128xf32>
      tpu.vector_store %arg9[%c0_15, %c0_16], %4 {strides = array<i32>} : memref<16x128xf32, #tpu.memory_space<vmem>>, vector<16x128xf32>,
    } else {
    }
    %c0_i32_9 = arith.constant 0 : i32
    %13 = arith.cmpi sgt, %arg2, %c0_i32_9 : i32
    %14 = arith.extui %13 : i1 to i32
    %c0_i32_10 = arith.constant 0 : i32
    %15 = arith.cmpi ne, %14, %c0_i32_10 : i32
    scf.if %15 {
      %c0_15 = arith.constant 0 : index
      %c0_16 = arith.constant 0 : index
      %24 = vector.load %arg9[%c0_15, %c0_16] : memref<16x128xf32, #tpu.memory_space<vmem>>, vector<16x128xf32>
      %25 = arith.addf %24, %4 : vector<16x128xf32>
      %c0_17 = arith.constant 0 : index
      %c0_18 = arith.constant 0 : index
      %26 = vector.load %arg9[%c0_17, %c0_18] : memref<16x128xf32, #tpu.memory_space<vmem>>, vector<16x128xf32>
      tpu.vector_store %arg9[%c0_17, %c0_18], %25 {strides = array<i32>} : memref<16x128xf32, #tpu.memory_space<vmem>>, vector<16x128xf32>,
    } else {
    }
    %c0_i32_11 = arith.constant 0 : i32
    %16 = arith.cmpi eq, %arg2, %c0_i32_11 : i32
    %17 = arith.extui %16 : i1 to i32
    %c0_i32_12 = arith.constant 0 : i32
    %18 = arith.cmpi ne, %17, %c0_i32_12 : i32
    scf.if %18 {
      %c0_15 = arith.constant 0 : index
      %c0_16 = arith.constant 0 : index
      %24 = vector.load %arg8[%c0_15, %c0_16] : memref<16x128xf32, #tpu.memory_space<vmem>>, vector<16x128xf32>
      %c0_17 = arith.constant 0 : index
      %c0_18 = arith.constant 0 : index
      %25 = vector.load %arg9[%c0_17, %c0_18] : memref<16x128xf32, #tpu.memory_space<vmem>>, vector<16x128xf32>
      %26 = arith.truncf %25 : vector<16x128xf32> to vector<16x128xbf16>
      %c0_19 = arith.constant 0 : index
      %c0_20 = arith.constant 0 : index
      %c0_21 = arith.constant 0 : index
      %27 = vector.load %arg6[%c0_19, %c0_20, %c0_21] : memref<1x128x128xbf16, #tpu.memory_space<vmem>>, vector<1x128x128xbf16>
      %28 = vector.shape_cast %27 : vector<1x128x128xbf16> to vector<128x128xbf16>
      %cst_22 = arith.constant dense<0.000000e+00> : vector<16x128xf32>
      %29 = tpu.matmul %26, %28, %cst_22 {dimension_numbers = #tpu.dot_dimension_numbers<[1], [0], [0], [1], [0, 0, 1, 1], [], []>} : vector<16x128xbf16>, vector<128x128xbf16>, vector<16x128xf32> -> vector<16x128xf32>
      %30 = arith.addf %24, %29 : vector<16x128xf32>
      %c0_23 = arith.constant 0 : index
      %c0_24 = arith.constant 0 : index
      %31 = vector.load %arg8[%c0_23, %c0_24] : memref<16x128xf32, #tpu.memory_space<vmem>>, vector<16x128xf32>
      tpu.vector_store %arg8[%c0_23, %c0_24], %30 {strides = array<i32>} : memref<16x128xf32, #tpu.memory_space<vmem>>, vector<16x128xf32>,
    } else {
    }
    %c1_i32 = arith.constant 1 : i32
    %19 = arith.cmpi eq, %arg1, %c1_i32 : i32
    %c0_i32_13 = arith.constant 0 : i32
    %20 = arith.cmpi eq, %arg2, %c0_i32_13 : i32
    %21 = arith.andi %19, %20 : i1
    %22 = arith.extui %21 : i1 to i32
    %c0_i32_14 = arith.constant 0 : i32
    %23 = arith.cmpi ne, %22, %c0_i32_14 : i32
    scf.if %23 {
      %c0_15 = arith.constant 0 : index
      %c0_16 = arith.constant 0 : index
      %24 = vector.load %arg8[%c0_15, %c0_16] : memref<16x128xf32, #tpu.memory_space<vmem>>, vector<16x128xf32>
      %c0_17 = arith.constant 0 : index
      %c0_18 = arith.constant 0 : index
      %25 = vector.load %arg7[%c0_17, %c0_18] : memref<1x128xf32, #tpu.memory_space<vmem>>, vector<1x128xf32>
      %26 = vector.broadcast %25 : vector<1x128xf32> to vector<16x128xf32>
      %27 = arith.addf %24, %26 : vector<16x128xf32>
      %cst_19 = arith.constant 0.000000e+00 : f32
      %28 = vector.broadcast %cst_19 : f32 to vector<16x128xf32>
      %29 = arith.maximumf %27, %28 : vector<16x128xf32>
      %c0_20 = arith.constant 0 : index
      %c0_21 = arith.constant 0 : index
      %30 = vector.load %arg8[%c0_20, %c0_21] : memref<16x128xf32, #tpu.memory_space<vmem>>, vector<16x128xf32>
      tpu.vector_store %arg8[%c0_20, %c0_21], %29 {strides = array<i32>} : memref<16x128xf32, #tpu.memory_space<vmem>>, vector<16x128xf32>,
    } else {
    }
    return
  }
  func.func @transform_0(%arg0: i32, %arg1: i32, %arg2: i32, %arg3: memref<2xi32, #tpu.memory_space<smem>>) -> (i32, i32, i32) {
    %c0_i32 = arith.constant 0 : i32
    return %arg1, %arg0, %arg2 : i32, i32, i32
  }
  func.func @transform_1(%arg0: i32, %arg1: i32, %arg2: i32, %arg3: memref<2xi32, #tpu.memory_space<smem>>) -> (i32, i32, i32) {
    %0 = arith.index_cast %arg1 : i32 to index
    %1 = memref.load %arg3[%0] : memref<2xi32, #tpu.memory_space<smem>>
    %c0_i32 = arith.constant 0 : i32
    %c0_i32_0 = arith.constant 0 : i32
    return %1, %arg2, %c0_i32 : i32, i32, i32
  }
  func.func @transform_2(%arg0: i32, %arg1: i32, %arg2: i32, %arg3: memref<2xi32, #tpu.memory_space<smem>>) -> (i32, i32, i32) {
    %c0_i32 = arith.constant 0 : i32
    %c0_i32_0 = arith.constant 0 : i32
    %c0_i32_1 = arith.constant 0 : i32
    return %arg1, %c0_i32, %c0_i32_0 : i32, i32, i32
  }
  func.func @transform_3(%arg0: i32, %arg1: i32, %arg2: i32, %arg3: memref<2xi32, #tpu.memory_space<smem>>) -> (i32, i32) {
    %c0_i32 = arith.constant 0 : i32
    %c0_i32_0 = arith.constant 0 : i32
    %c0_i32_1 = arith.constant 0 : i32
    return %c0_i32, %c0_i32_0 : i32, i32
  }
  func.func @transform_4(%arg0: i32, %arg1: i32, %arg2: i32, %arg3: memref<2xi32, #tpu.memory_space<smem>>) -> (i32, i32) {
    %c0_i32 = arith.constant 0 : i32
    %c0_i32_0 = arith.constant 0 : i32
    return %arg0, %c0_i32 : i32, i32
  }
}

</mosaic_0001>

<llo_original>
// kernel: tpu_custom_call.1
$region0: #{tpu_custom_call.1}
  #allocation0 [shape = 'u32[]', space=smem, size = 0x4, offset = 0x4, fixed_abs, tag = 'smem constant byte address 0x4 - core index']
  #allocation1 [shape = 'u32[144,128]{1,0:T(1,128)}', space=vmem, size = 0x12000, scoped, tag = 'internal scratch']
  #allocation2 [shape = 'f32[16,128]{1,0:T(8,128)}', space=vmem, size = 0x2000, scoped, tag = 'scratch operand']
  #allocation3 [shape = 's32[1]{0}', space=sflag, size = 0x4, scoped, tag = 'scoped memory for tpu_custom_call.1']
  #allocation4 [shape = 'u8[512]{0}', space=smem, size = 0x200, scoped, tag = 'prefetched SMEM operand 0']
  %s0 = inlined_call_operand.hbm [shape: s32[2], index: 0, kind: input, shape index: {}]
  %s1 = inlined_call_operand.hbm [shape: bf16[2,16,128], index: 1, kind: input, shape index: {}]
  %s2 = inlined_call_operand.hbm [shape: bf16[2,128,128], index: 2, kind: input, shape index: {}]
  %s3 = inlined_call_operand.hbm [shape: bf16[2,128,128], index: 3, kind: input, shape index: {}]
  %s4 = inlined_call_operand.vmem [shape: f32[1,128], index: 4, kind: input, shape index: {}]
  %s5 = inlined_call_operand.hbm [shape: f32[16,128], index: 5, kind: output, shape index: {}]
  %s6 = sld [smem:[#allocation0]]
  $region81: #{tpu_custom_call.1} parent=0
    _
  %s8 = ssub.s32 1, %s6
  %s9 = scalar_select 0, %s8, %s6
  %11 = dma.hbm_to_smem %s0, 16, [#allocation4], [#allocation3]
  %12 = dma.done [#allocation3], 16
  %13 = sfence
  $region1: #{tpu_custom_call.1} parent=0
    #allocation5 [shape = 'u8[8192]{0}', space=vmem, size = 0x2000, scoped, tag = 'input window, operand 1']
    #allocation6 [shape = 's32[2]{0}', space=sflag, size = 0x8, scoped, tag = 'scoped memory for tpu_custom_call.1']
    #allocation7 [shape = 's32[2]{0}', space=sflag, size = 0x8, scoped, tag = 'scoped memory for tpu_custom_call.1']
    #allocation8 [shape = 'u8[65536]{0}', space=vmem, size = 0x10000, scoped, tag = 'input window, operand 2']
    #allocation9 [shape = 's32[2]{0}', space=sflag, size = 0x8, scoped, tag = 'scoped memory for tpu_custom_call.1']
    #allocation10 [shape = 'u8[65536]{0}', space=vmem, size = 0x10000, scoped, tag = 'input window, operand 3']
    #allocation11 [shape = 'u8[8192]{0}', space=vmem, size = 0x2000, scoped, tag = 'output window, operand 0, single buffered']
    %14 = vsyncpa [#allocation6], 0
    %s15 = scalar_lea.sflag [#allocation6], 1
    %16 = vsyncpa %s15, 0
    %17 = vsyncpa [#allocation9], 0
    %s18 = scalar_lea.sflag [#allocation9], 1
    %19 = vsyncpa %s18, 0
    %20 = vsyncpa [#allocation7], 0
    loop: start=0, step=1, limit=4
    $region2: #{tpu_custom_call.1} parent=1 // loop_pre_header
      _
    $region3: #{tpu_custom_call.1} parent=1 // loop_header
      %s22 = sphi 0, %s26
      %p23 = scmp.ge.s32.totalorder %s22, 4
      %s29 = sphi 0, %s48
      %s30 = sphi 0, %s44
      %s31 = sphi 0, %s40
      %s32 = sphi 0, %s29
      %s33 = sphi 0, %s30
      %s34 = sphi 0, %s31
      %s35 = sphi 0, %s32
      %s36 = sphi 0, %s33
      %s37 = sphi 0, %s34
      %s55 = sphi 0, %s57
      %s58 = sphi 0, %s55
      %s59 = sphi 0, %s58
      %s75 = sphi 0, %s59
      %s85 = sphi 0, %s87
      %s88 = sphi 0, %s85
      %s89 = sphi 0, %s88
      %s105 = sphi 0, %s89
      %s111 = sphi 0, %s113
      %s114 = sphi 0, %s111
      %s115 = sphi 0, %s114
      %s131 = sphi 0, %s115
      %s135 = sphi 0, %s135
      %s137 = sphi 0, %s135
      %s138 = sphi 0, %s137
      %s152 = sphi 0, %s138
      %s158 = sphi 0, %s160
      %s161 = sphi 0, %s158
      %s162 = sphi 0, %s161
      %s178 = sphi 0, %s162
    $region4: #{tpu_custom_call.1} parent=1 // loop_header_branch
      %25 = sbr.rel (%p23) target = $region8
    $region5: #{tpu_custom_call.1} parent=1 // loop_body
      %s27 = ssub.s32 %s22, 1
      %s28 = ssub.s32 %s22, 2
      %s38 = sadd.s32 1, %s31
      %p39 = scmp.ge.s32.totalorder %s38, 1
      %s40 = scalar_select %p39, 0, %s38
      %s41 = sadd.s32 1, %s30
      %s42 = scalar_select %p39, %s41, %s30
      %p43 = scmp.ge.s32.totalorder %s42, 2
      %s44 = scalar_select %p43, 0, %s42
      %s45 = sadd.s32 1, %s29
      %s46 = scalar_select %p43, %s45, %s29
      %p47 = scmp.ge.s32.totalorder %s46, 1
      %s48 = scalar_select %p47, 0, %s46
      %s49 = ssub.s32 %s30, %s44
      %s50 = ssub.s32 %s29, %s48
      %s51 = sor.u32 %s49, %s50
      %s52 = ssub.s32 %s31, %s40
      %s53 = sor.u32 %s51, %s52
      %p54 = scmp.eq.s32.totalorder %s53, 0
      %s56 = sadd.s32 %s55, 1
      %s57 = scalar_select %p54, %s55, %s56
      %p60 = pneg %p54
      %p61 = scmp.eq.s32.totalorder %s22, 1
      %p62 = por %p60, %p61
      %p63 = scmp.ne.s32.totalorder %s55, %s58
      %p64 = scmp.eq.s32.totalorder %s22, 0
      %p65 = por %p63, %p64
      %p66 = scmp.ne.s32.totalorder %s55, %s58
      %p67 = scmp.eq.s32.totalorder %s27, 1
      %p68 = por %p66, %p67
      %p69 = scmp.ne.s32.totalorder %s58, %s59
      %p70 = scmp.eq.s32.totalorder %s27, 0
      %p71 = por %p69, %p70
      %p72 = scmp.ne.s32.totalorder %s58, %s59
      %p73 = scmp.eq.s32.totalorder %s28, 1
      %p74 = por %p72, %p73
      %p76 = scmp.ne.s32.totalorder %s59, %s75
      %p77 = scmp.eq.s32.totalorder %s28, 0
      %p78 = por %p76, %p77
      %s79 = sld [smem:[#allocation4 + %s30]]
      %s80 = sld [smem:[#allocation4 + %s44]]
      %s81 = ssub.s32 %s79, %s80
      %s82 = ssub.s32 %s31, %s40
      %s83 = sor.u32 %s81, %s82
      %p84 = scmp.eq.s32.totalorder %s83, 0
      %s86 = sadd.s32 %s85, 1
      %s87 = scalar_select %p84, %s85, %s86
      %p90 = pneg %p84
      %p91 = scmp.eq.s32.totalorder %s22, 1
      %p92 = por %p90, %p91
      %p93 = scmp.ne.s32.totalorder %s85, %s88
      %p94 = scmp.eq.s32.totalorder %s22, 0
      %p95 = por %p93, %p94
      %p96 = scmp.ne.s32.totalorder %s85, %s88
      %p97 = scmp.eq.s32.totalorder %s27, 1
      %p98 = por %p96, %p97
      %p99 = scmp.ne.s32.totalorder %s88, %s89
      %p100 = scmp.eq.s32.totalorder %s27, 0
      %p101 = por %p99, %p100
      %p102 = scmp.ne.s32.totalorder %s88, %s89
      %p103 = scmp.eq.s32.totalorder %s28, 1
      %p104 = por %p102, %p103
      %p106 = scmp.ne.s32.totalorder %s89, %s105
      %p107 = scmp.eq.s32.totalorder %s28, 0
      %p108 = por %p106, %p107
      %s109 = ssub.s32 %s30, %s44
      %p110 = scmp.eq.s32.totalorder %s109, 0
      %s112 = sadd.s32 %s111, 1
      %s113 = scalar_select %p110, %s111, %s112
      %p116 = pneg %p110
      %p117 = scmp.eq.s32.totalorder %s22, 1
      %p118 = por %p116, %p117
      %p119 = scmp.ne.s32.totalorder %s111, %s114
      %p120 = scmp.eq.s32.totalorder %s22, 0
      %p121 = por %p119, %p120
      %p122 = scmp.ne.s32.totalorder %s111, %s114
      %p123 = scmp.eq.s32.totalorder %s27, 1
      %p124 = por %p122, %p123
      %p125 = scmp.ne.s32.totalorder %s114, %s115
      %p126 = scmp.eq.s32.totalorder %s27, 0
      %p127 = por %p125, %p126
      %p128 = scmp.ne.s32.totalorder %s114, %s115
      %p129 = scmp.eq.s32.totalorder %s28, 1
      %p130 = por %p128, %p129
      %p132 = scmp.ne.s32.totalorder %s115, %s131
      %p133 = scmp.eq.s32.totalorder %s28, 0
      %p134 = por %p132, %p133
      %s136 = sadd.s32 %s135, 1
      %p139 = scmp.eq.s32.totalorder %s22, 1
      %p140 = scmp.ne.s32.totalorder %s135, %s137
      %p141 = scmp.eq.s32.totalorder %s22, 0
      %p142 = por %p140, %p141
      %p143 = scmp.ne.s32.totalorder %s135, %s137
      %p144 = scmp.eq.s32.totalorder %s27, 1
      %p145 = por %p143, %p144
      %p146 = scmp.ne.s32.totalorder %s137, %s138
      %p147 = scmp.eq.s32.totalorder %s27, 0
      %p148 = por %p146, %p147
      %p149 = scmp.ne.s32.totalorder %s137, %s138
      %p150 = scmp.eq.s32.totalorder %s28, 1
      %p151 = por %p149, %p150
      %p153 = scmp.ne.s32.totalorder %s138, %s152
      %p154 = scmp.eq.s32.totalorder %s28, 0
      %p155 = por %p153, %p154
      %s156 = ssub.s32 %s29, %s48
      %p157 = scmp.eq.s32.totalorder %s156, 0
      %s159 = sadd.s32 %s158, 1
      %s160 = scalar_select %p157, %s158, %s159
      %p163 = pneg %p157
      %p164 = scmp.eq.s32.totalorder %s22, 1
      %p165 = por %p163, %p164
      %p166 = scmp.ne.s32.totalorder %s158, %s161
      %p167 = scmp.eq.s32.totalorder %s22, 0
      %p168 = por %p166, %p167
      %p169 = scmp.ne.s32.totalorder %s158, %s161
      %p170 = scmp.eq.s32.totalorder %s27, 1
      %p171 = por %p169, %p170
      %p172 = scmp.ne.s32.totalorder %s161, %s162
      %p173 = scmp.eq.s32.totalorder %s27, 0
      %p174 = por %p172, %p173
      %p175 = scmp.ne.s32.totalorder %s161, %s162
      %p176 = scmp.eq.s32.totalorder %s28, 1
      %p177 = por %p175, %p176
      %p179 = scmp.ne.s32.totalorder %s162, %s178
      %p180 = scmp.eq.s32.totalorder %s28, 0
      %p181 = por %p179, %p180
      %p182 = scmp.le.s32.totalorder 1, %s22
      %p183 = scmp.lt.s32.totalorder %s22, 3
      %p184 = pnand %p182, %p183
      %p185 = pneg %p184
      // Predicated region
      $region9: #{tpu_custom_call.1} parent=5 // pred_check
        _
      $region10: #{tpu_custom_call.1} parent=5 // pred_check_branch
        %187 = sbr.rel (%p184) target = $region12
      $region11: #{tpu_custom_call.1} parent=5 // pred_region
        %s188 = ssub.s32 %s22, 1
        // Predicated region
        $region13: #{tpu_custom_call.1} parent=11 // pred_check
          %p189 = pneg %p148
        $region14: #{tpu_custom_call.1} parent=11 // pred_check_branch
          %191 = sbr.rel (%p189) target = $region16
        $region15: #{tpu_custom_call.1} parent=11 // pred_region
          _
        $region16: #{tpu_custom_call.1} parent=11 // pred_fallthru
          _
      $region12: #{tpu_custom_call.1} parent=5 // pred_fallthru
        _
      %p192 = scmp.lt.s32.totalorder %s22, 2
      // Predicated region
      $region17: #{tpu_custom_call.1} parent=5 // pred_check
        %p193 = pneg %p192
      $region18: #{tpu_custom_call.1} parent=5 // pred_check_branch
        %195 = sbr.rel (%p193) target = $region20
      $region19: #{tpu_custom_call.1} parent=5 // pred_region
        // Predicated region
        $region21: #{tpu_custom_call.1} parent=19 // pred_check
          %p196 = pneg %p65
        $region22: #{tpu_custom_call.1} parent=19 // pred_check_branch
          %198 = sbr.rel (%p196) target = $region24
        $region23: #{tpu_custom_call.1} parent=19 // pred_region
          %s199 = sand.u32 %s55, 1
          %s200 = scalar_lea.sflag [#allocation6], %s199
          %s201 = sand.u32 %s55, 1
          %s202 = smul.addr %s201, 8
          %s203 = scalar_lea.vmem [#allocation5], %s202
          %s204 = smul.u32 2, %s29
          %s206 = ssub.s32 128, 128
          %207 = vsyncadd %s200, %s206
          %s208 = sadd.s32 %s31, %s204
          %s209 = smul.addr %s30, 2
          %s210 = sadd.s32 %s208, %s209
          %s211 = smul.addr %s210, 64
          %s212 = scalar_lea.hbm %s1, %s211
          %s213 = sshll.u32 %s203, 4
          %s214 = int_to_ptr.vmem [resolvable:$true] %s213
          %219 = dma.hbm_to_vmem [thread:$0]  %s212, 128, %s214, %s200, 64, 64, 4
        $region24: #{tpu_custom_call.1} parent=19 // pred_fallthru
          _
        // Predicated region
        $region25: #{tpu_custom_call.1} parent=19 // pred_check
          %p220 = pneg %p95
        $region26: #{tpu_custom_call.1} parent=19 // pred_check_branch
          %222 = sbr.rel (%p220) target = $region28
        $region27: #{tpu_custom_call.1} parent=19 // pred_region
          %s223 = sand.u32 %s22, 1
          %s224 = scalar_lea.sflag [#allocation9], %s223
          %s225 = sand.u32 %s85, 1
          %s226 = smul.addr %s225, 64
          %s227 = scalar_lea.vmem [#allocation8], %s226
          %s228 = sld [smem:[#allocation4 + %s30]]
          %s229 = smul.u32 16, %s31
          %s231 = ssub.s32 1024, 1024
          %232 = vsyncadd %s224, %s231
          %s233 = smul.addr %s228, 16
          %s234 = sadd.s32 %s229, %s233
          %s235 = smul.addr %s234, 64
          %s236 = scalar_lea.hbm %s2, %s235
          %s237 = sshll.u32 %s227, 4
          %s238 = int_to_ptr.vmem [resolvable:$true] %s237
          %243 = dma.hbm_to_vmem [thread:$0]  %s236, 1024, %s238, %s224, 64, 64, 4
        $region28: #{tpu_custom_call.1} parent=19 // pred_fallthru
          _
        // Predicated region
        $region29: #{tpu_custom_call.1} parent=19 // pred_check
          %p244 = pneg %p121
        $region30: #{tpu_custom_call.1} parent=19 // pred_check_branch
          %246 = sbr.rel (%p244) target = $region32
        $region31: #{tpu_custom_call.1} parent=19 // pred_region
          %s247 = sand.u32 %s22, 1
          %s248 = scalar_lea.sflag [#allocation9], %s247
          %s249 = sand.u32 %s111, 1
          %s250 = smul.addr %s249, 64
          %s251 = scalar_lea.vmem [#allocation10], %s250
          %s253 = ssub.s32 1024, 1024
          %254 = vsyncadd %s248, %s253
          %s255 = smul.addr %s30, 16
          %s256 = smul.addr %s255, 64
          %s257 = scalar_lea.hbm %s3, %s256
          %s258 = sshll.u32 %s251, 4
          %s259 = int_to_ptr.vmem [resolvable:$true] %s258
          %264 = dma.hbm_to_vmem [thread:$0]  %s257, 1024, %s259, %s248, 64, 64, 4
        $region32: #{tpu_custom_call.1} parent=19 // pred_fallthru
          _
      $region20: #{tpu_custom_call.1} parent=5 // pred_fallthru
        _
      %p265 = scmp.le.s32.totalorder 1, %s22
      %p266 = scmp.lt.s32.totalorder %s22, 3
      %p267 = pnand %p265, %p266
      %p268 = pneg %p267
      // Predicated region
      $region33: #{tpu_custom_call.1} parent=5 // pred_check
        _
      $region34: #{tpu_custom_call.1} parent=5 // pred_check_branch
        %270 = sbr.rel (%p267) target = $region36
      $region35: #{tpu_custom_call.1} parent=5 // pred_region
        %s271 = ssub.s32 %s22, 1
        %s272 = sand.u32 %s58, 1
        %s273 = scalar_lea.sflag [#allocation6], %s272
        %s274 = sand.u32 %s58, 1
        %s275 = smul.addr %s274, 8
        %s276 = scalar_lea.vmem [#allocation5], %s275
        // Predicated region
        $region37: #{tpu_custom_call.1} parent=35 // pred_check
          %p277 = pneg %p71
        $region38: #{tpu_custom_call.1} parent=35 // pred_check_branch
          %279 = sbr.rel (%p277) target = $region40
        $region39: #{tpu_custom_call.1} parent=35 // pred_region
          %280 = dma.done %s273, 128
        $region40: #{tpu_custom_call.1} parent=35 // pred_fallthru
          _
        %s281 = sand.u32 %s27, 1
        %s282 = scalar_lea.sflag [#allocation9], %s281
        %s283 = sand.u32 %s88, 1
        %s284 = smul.addr %s283, 64
        %s285 = scalar_lea.vmem [#allocation8], %s284
        // Predicated region
        $region41: #{tpu_custom_call.1} parent=35 // pred_check
          %p286 = pneg %p101
        $region42: #{tpu_custom_call.1} parent=35 // pred_check_branch
          %288 = sbr.rel (%p286) target = $region44
        $region43: #{tpu_custom_call.1} parent=35 // pred_region
          %289 = dma.done %s282, 1024
        $region44: #{tpu_custom_call.1} parent=35 // pred_fallthru
          _
        %s290 = sand.u32 %s27, 1
        %s291 = scalar_lea.sflag [#allocation9], %s290
        %s292 = sand.u32 %s114, 1
        %s293 = smul.addr %s292, 64
        %s294 = scalar_lea.vmem [#allocation10], %s293
        // Predicated region
        $region45: #{tpu_custom_call.1} parent=35 // pred_check
          %p295 = pneg %p127
        $region46: #{tpu_custom_call.1} parent=35 // pred_check_branch
          %297 = sbr.rel (%p295) target = $region48
        $region47: #{tpu_custom_call.1} parent=35 // pred_region
          %298 = dma.done %s291, 1024
        $region48: #{tpu_custom_call.1} parent=35 // pred_fallthru
          _
        %s299 = sand.u32 %s58, 1
        %s300 = scalar_lea.sflag [#allocation6], %s299
        %s301 = sand.u32 %s58, 1
        %s302 = smul.addr %s301, 8
        %s303 = scalar_lea.vmem [#allocation5], %s302
        %p304 = pneg %p71
        %p305 = pneg %p68
        %s306 = sand.u32 %s27, 1
        %s307 = scalar_lea.sflag [#allocation9], %s306
        %s308 = sand.u32 %s88, 1
        %s309 = smul.addr %s308, 64
        %s310 = scalar_lea.vmem [#allocation8], %s309
        %p311 = pneg %p101
        %p312 = pneg %p98
        %s313 = sand.u32 %s27, 1
        %s314 = scalar_lea.sflag [#allocation9], %s313
        %s315 = sand.u32 %s114, 1
        %s316 = smul.addr %s315, 64
        %s317 = scalar_lea.vmem [#allocation10], %s316
        %p318 = pneg %p127
        %p319 = pneg %p124
        %p320 = pneg %p148
        %p321 = pneg %p145
        %p322 = pneg %p174
        %p323 = pneg %p171
        %s324 = smul.u32 2, %s32
        %s325 = sld [smem:[#allocation4 + %s33]]
        %s326 = smul.u32 16, %s34
        %s327 = smul.u32 2, %s32
        %v329 = vld [vmem:[%s276] sm:$0xf]
        %v330 = vld [vmem:[%s276 + $0x4] sm:$0xf]
        %v331 = vld [vmem:[%s285] sm:$0xf]
        %v332 = vld [vmem:[%s285 + $0x4] sm:$0xf]
        %v333 = vld [vmem:[%s285 + $0x8] sm:$0xf]
        %v334 = vld [vmem:[%s285 + $0xc] sm:$0xf]
        %v335 = vld [vmem:[%s285 + $0x10] sm:$0xf]
        %v336 = vld [vmem:[%s285 + $0x14] sm:$0xf]
        %v337 = vld [vmem:[%s285 + $0x18] sm:$0xf]
        %v338 = vld [vmem:[%s285 + $0x1c] sm:$0xf]
        %v339 = vld [vmem:[%s285 + $0x20] sm:$0xf]
        %v340 = vld [vmem:[%s285 + $0x24] sm:$0xf]
        %v341 = vld [vmem:[%s285 + $0x28] sm:$0xf]
        %v342 = vld [vmem:[%s285 + $0x2c] sm:$0xf]
        %v343 = vld [vmem:[%s285 + $0x30] sm:$0xf]
        %v344 = vld [vmem:[%s285 + $0x34] sm:$0xf]
        %v345 = vld [vmem:[%s285 + $0x38] sm:$0xf]
        %v346 = vld [vmem:[%s285 + $0x3c] sm:$0xf]
        %v349 = vunpack.c.l.b16 %v329
        %v350 = vunpack.c.l.b16 %v330
        %v351 = vpack.c.b16 %v350, %v349
        %v369 = vunpack.c.l.b16 %v331
        %v370 = vunpack.c.l.b16 %v332
        %v371 = vunpack.c.l.b16 %v333
        %v372 = vunpack.c.l.b16 %v334
        %v373 = vunpack.c.l.b16 %v335
        %v374 = vunpack.c.l.b16 %v336
        %v375 = vunpack.c.l.b16 %v337
        %v376 = vunpack.c.l.b16 %v338
        %v377 = vunpack.c.l.b16 %v339
        %v378 = vunpack.c.l.b16 %v340
        %v379 = vunpack.c.l.b16 %v341
        %v380 = vunpack.c.l.b16 %v342
        %v381 = vunpack.c.l.b16 %v343
        %v382 = vunpack.c.l.b16 %v344
        %v383 = vunpack.c.l.b16 %v345
        %v384 = vunpack.c.l.b16 %v346
        %v385 = vpack.c.b16 %v370, %v369
        %v386 = vpack.c.b16 %v372, %v371
        %v387 = vpack.c.b16 %v374, %v373
        %v388 = vpack.c.b16 %v376, %v375
        %v389 = vpack.c.b16 %v378, %v377
        %v390 = vpack.c.b16 %v380, %v379
        %v391 = vpack.c.b16 %v382, %v381
        %v392 = vpack.c.b16 %v384, %v383
        %401 = vmatprep.subr.bf16.mxu0 0
        %402 = vmatpush1.bf16.msra.mxu0 %v385
        %403 = vmatprep.subr.bf16.mxu0 0
        %404 = vmatpush1.bf16.msra.mxu0 %v386
        %405 = vmatprep.subr.bf16.mxu0 0
        %406 = vmatpush1.bf16.msra.mxu0 %v387
        %407 = vmatprep.subr.bf16.mxu0 0
        %408 = vmatpush1.bf16.msra.mxu0 %v388
        %409 = vmatprep.subr.bf16.mxu0 0
        %410 = vmatpush1.bf16.msra.mxu0 %v389
        %411 = vmatprep.subr.bf16.mxu0 0
        %412 = vmatpush1.bf16.msra.mxu0 %v390
        %413 = vmatprep.subr.bf16.mxu0 0
        %414 = vmatpush1.bf16.msra.mxu0 %v391
        %415 = vmatprep.subr.bf16.mxu0 0
        %416 = vmatpush1.bf16.msra.mxu0 %v392
        %417 = vmatprep.subr.bf16.mxu0 0
        %418 = vmatpush1.bf16.msra.mxu0 0
        %419 = vmatprep.subr.bf16.mxu0 0
        %420 = vmatpush1.bf16.msra.mxu0 0
        %421 = vmatprep.subr.bf16.mxu0 0
        %422 = vmatpush1.bf16.msra.mxu0 0
        %423 = vmatprep.subr.bf16.mxu0 0
        %424 = vmatpush1.bf16.msra.mxu0 0
        %425 = vmatprep.subr.bf16.mxu0 0
        %426 = vmatpush1.bf16.msra.mxu0 0
        %427 = vmatprep.subr.bf16.mxu0 0
        %428 = vmatpush1.bf16.msra.mxu0 0
        %429 = vmatprep.subr.bf16.mxu0 0
        %430 = vmatpush1.bf16.msra.mxu0 0
        %431 = vmatprep.subr.bf16.mxu0 0
        %432 = vmatpush1.bf16.msra.mxu0 0
        %433 = vmatprep.mubr.bf16.mxu0 0
        %434 = vmatmul.mubr.bf16.gmra.mrb[0].mxu0 %v351
        %v435 = vpop.f32.mrb[0].mxu0
        %v436 = vadd.f32 0.0, %v435
        %v437 = vpop.f32.mrb[0].mxu0
        %v438 = vpop.f32.mrb[0].mxu0
        %v439 = vadd.f32 0.0, %v438
        %v440 = vpop.f32.mrb[0].mxu0
        %441 = vdwg.mxu0
        %p442 = scmp.eq.s32.totalorder %s33, 0
        %p443 = scmp.eq.s32.totalorder %s34, 0
        %p444 = pnand %p442, %p443
        %p445 = pneg %p444
        // Predicated region
        $region49: #{tpu_custom_call.1} parent=35 // pred_check
          _
        $region50: #{tpu_custom_call.1} parent=35 // pred_check_branch
          %447 = sbr.rel (%p444) target = $region52
        $region51: #{tpu_custom_call.1} parent=35 // pred_region
          %448 = vst [vmem:[#allocation11] sm:$0xff] 0.0
          %449 = vst [vmem:[#allocation11 + $0x8] sm:$0xff] 0.0
        $region52: #{tpu_custom_call.1} parent=35 // pred_fallthru
          _
        // Predicated region
        $region53: #{tpu_custom_call.1} parent=35 // pred_check
          %p450 = pneg %p443
        $region54: #{tpu_custom_call.1} parent=35 // pred_check_branch
          %452 = sbr.rel (%p450) target = $region56
        $region55: #{tpu_custom_call.1} parent=35 // pred_region
          %453 = vst [vmem:[#allocation2] sm:$0xff] %v436
          %454 = vst [vmem:[#allocation2 + $0x8] sm:$0xff] %v439
        $region56: #{tpu_custom_call.1} parent=35 // pred_fallthru
          _
        %p455 = scmp.gt.s32.totalorder %s34, 0
        // Predicated region
        $region57: #{tpu_custom_call.1} parent=35 // pred_check
          %p456 = pneg %p455
        $region58: #{tpu_custom_call.1} parent=35 // pred_check_branch
          %458 = sbr.rel (%p456) target = $region60
        $region59: #{tpu_custom_call.1} parent=35 // pred_region
          %v459 = vld [vmem:[#allocation2] sm:$0xff]
          %v460 = vld [vmem:[#allocation2 + $0x8] sm:$0xff]
          %v461 = vadd.f32 %v459, %v436
          %v462 = vadd.f32 %v460, %v439
          %463 = vst [vmem:[#allocation2] sm:$0xff] %v461
          %464 = vst [vmem:[#allocation2 + $0x8] sm:$0xff] %v462
        $region60: #{tpu_custom_call.1} parent=35 // pred_fallthru
          _
        // Predicated region
        $region61: #{tpu_custom_call.1} parent=35 // pred_check
          %p465 = pneg %p443
        $region62: #{tpu_custom_call.1} parent=35 // pred_check_branch
          %467 = sbr.rel (%p465) target = $region64
        $region63: #{tpu_custom_call.1} parent=35 // pred_region
          %v468 = vld [vmem:[#allocation11] sm:$0xff]
          %v469 = vld [vmem:[#allocation11 + $0x8] sm:$0xff]
          %v470 = vld [vmem:[#allocation2] sm:$0xff]
          %v471 = vld [vmem:[#allocation2 + $0x8] sm:$0xff]
          %v472 = vpack.c.bf16 %v471, %v470
          %v473 = vld [vmem:[%s294] sm:$0xf]
          %v474 = vld [vmem:[%s294 + $0x4] sm:$0xf]
          %v475 = vld [vmem:[%s294 + $0x8] sm:$0xf]
          %v476 = vld [vmem:[%s294 + $0xc] sm:$0xf]
          %v477 = vld [vmem:[%s294 + $0x10] sm:$0xf]
          %v478 = vld [vmem:[%s294 + $0x14] sm:$0xf]
          %v479 = vld [vmem:[%s294 + $0x18] sm:$0xf]
          %v480 = vld [vmem:[%s294 + $0x1c] sm:$0xf]
          %v481 = vld [vmem:[%s294 + $0x20] sm:$0xf]
          %v482 = vld [vmem:[%s294 + $0x24] sm:$0xf]
          %v483 = vld [vmem:[%s294 + $0x28] sm:$0xf]
          %v484 = vld [vmem:[%s294 + $0x2c] sm:$0xf]
          %v485 = vld [vmem:[%s294 + $0x30] sm:$0xf]
          %v486 = vld [vmem:[%s294 + $0x34] sm:$0xf]
          %v487 = vld [vmem:[%s294 + $0x38] sm:$0xf]
          %v488 = vld [vmem:[%s294 + $0x3c] sm:$0xf]
          %v505 = vunpack.c.l.b16 %v473
          %v506 = vunpack.c.l.b16 %v474
          %v507 = vunpack.c.l.b16 %v475
          %v508 = vunpack.c.l.b16 %v476
          %v509 = vunpack.c.l.b16 %v477
          %v510 = vunpack.c.l.b16 %v478
          %v511 = vunpack.c.l.b16 %v479
          %v512 = vunpack.c.l.b16 %v480
          %v513 = vunpack.c.l.b16 %v481
          %v514 = vunpack.c.l.b16 %v482
          %v515 = vunpack.c.l.b16 %v483
          %v516 = vunpack.c.l.b16 %v484
          %v517 = vunpack.c.l.b16 %v485
          %v518 = vunpack.c.l.b16 %v486
          %v519 = vunpack.c.l.b16 %v487
          %v520 = vunpack.c.l.b16 %v488
          %v521 = vpack.c.b16 %v506, %v505
          %v522 = vpack.c.b16 %v508, %v507
          %v523 = vpack.c.b16 %v510, %v509
          %v524 = vpack.c.b16 %v512, %v511
          %v525 = vpack.c.b16 %v514, %v513
          %v526 = vpack.c.b16 %v516, %v515
          %v527 = vpack.c.b16 %v518, %v517
          %v528 = vpack.c.b16 %v520, %v519
          %537 = vmatprep.subr.bf16.mxu0 0
          %538 = vmatpush1.bf16.msra.mxu0 %v521
          %539 = vmatprep.subr.bf16.mxu0 0
          %540 = vmatpush1.bf16.msra.mxu0 %v522
          %541 = vmatprep.subr.bf16.mxu0 0
          %542 = vmatpush1.bf16.msra.mxu0 %v523
          %543 = vmatprep.subr.bf16.mxu0 0
          %544 = vmatpush1.bf16.msra.mxu0 %v524
          %545 = vmatprep.subr.bf16.mxu0 0
          %546 = vmatpush1.bf16.msra.mxu0 %v525
          %547 = vmatprep.subr.bf16.mxu0 0
          %548 = vmatpush1.bf16.msra.mxu0 %v526
          %549 = vmatprep.subr.bf16.mxu0 0
          %550 = vmatpush1.bf16.msra.mxu0 %v527
          %551 = vmatprep.subr.bf16.mxu0 0
          %552 = vmatpush1.bf16.msra.mxu0 %v528
          %553 = vmatprep.subr.bf16.mxu0 0
          %554 = vmatpush1.bf16.msra.mxu0 0
          %555 = vmatprep.subr.bf16.mxu0 0
          %556 = vmatpush1.bf16.msra.mxu0 0
          %557 = vmatprep.subr.bf16.mxu0 0
          %558 = vmatpush1.bf16.msra.mxu0 0
          %559 = vmatprep.subr.bf16.mxu0 0
          %560 = vmatpush1.bf16.msra.mxu0 0
          %561 = vmatprep.subr.bf16.mxu0 0
          %562 = vmatpush1.bf16.msra.mxu0 0
          %563 = vmatprep.subr.bf16.mxu0 0
          %564 = vmatpush1.bf16.msra.mxu0 0
          %565 = vmatprep.subr.bf16.mxu0 0
          %566 = vmatpush1.bf16.msra.mxu0 0
          %567 = vmatprep.subr.bf16.mxu0 0
          %568 = vmatpush1.bf16.msra.mxu0 0
          %569 = vmatprep.mubr.bf16.mxu0 0
          %570 = vmatmul.mubr.bf16.gmra.mrb[0].mxu0 %v472
          %v571 = vpop.f32.mrb[0].mxu0
          %v572 = vadd.f32 0.0, %v571
          %v573 = vpop.f32.mrb[0].mxu0
          %v574 = vpop.f32.mrb[0].mxu0
          %v575 = vadd.f32 0.0, %v574
          %v576 = vpop.f32.mrb[0].mxu0
          %577 = vdwg.mxu0
          %v578 = vadd.f32 %v468, %v572
          %v579 = vadd.f32 %v469, %v575
          %580 = vst [vmem:[#allocation11] sm:$0xff] %v578
          %581 = vst [vmem:[#allocation11 + $0x8] sm:$0xff] %v579
        $region64: #{tpu_custom_call.1} parent=35 // pred_fallthru
          _
        %p582 = scmp.eq.s32.totalorder %s33, 1
        %p583 = pnand %p582, %p443
        %p584 = pneg %p583
        // Predicated region
        $region65: #{tpu_custom_call.1} parent=35 // pred_check
          _
        $region66: #{tpu_custom_call.1} parent=35 // pred_check_branch
          %586 = sbr.rel (%p583) target = $region68
        $region67: #{tpu_custom_call.1} parent=35 // pred_region
          %v587 = vld [vmem:[#allocation11] sm:$0xff]
          %v588 = vld [vmem:[#allocation11 + $0x8] sm:$0xff]
          %v589 = vld [vmem:[%s4] sm:$0x1]
          %v591 = vlaneseq
          %v592 = vshrl.u32 %v591, 7
          %v593 = vsub.s32 0, %v592
          %v594 = vrot.slane %v589, %v593
          %v596 = vadd.f32 %v587, %v594
          %v597 = vadd.f32 %v588, %v594
          %v598 = vmax.f32 %v596, 0.0
          %v599 = vmax.f32 %v597, 0.0
          %600 = vst [vmem:[#allocation11] sm:$0xff] %v598
          %601 = vst [vmem:[#allocation11 + $0x8] sm:$0xff] %v599
        $region68: #{tpu_custom_call.1} parent=35 // pred_fallthru
          _
        // Predicated region
        $region69: #{tpu_custom_call.1} parent=35 // pred_check
          %p602 = pneg %p171
        $region70: #{tpu_custom_call.1} parent=35 // pred_check_branch
          %604 = sbr.rel (%p602) target = $region72
        $region71: #{tpu_custom_call.1} parent=35 // pred_region
          %s605 = smul.u32 2, %s32
          %s607 = ssub.s32 256, 256
          %608 = vsyncadd [#allocation7], %s607
          %s609 = smul.addr %s605, 128
          %s610 = scalar_lea.hbm %s5, %s609
          %s611 = sshll.u32 [#allocation11], 4
          %s612 = int_to_ptr.vmem [resolvable:$true] %s611
          %617 = dma.vmem_to_hbm [thread:$0]  %s612, 256, %s610, [#allocation7], 128, 128, 8
        $region72: #{tpu_custom_call.1} parent=35 // pred_fallthru
          _
        // Predicated region
        $region73: #{tpu_custom_call.1} parent=35 // pred_check
          %p618 = pneg %p171
        $region74: #{tpu_custom_call.1} parent=35 // pred_check_branch
          %620 = sbr.rel (%p618) target = $region76
        $region75: #{tpu_custom_call.1} parent=35 // pred_region
          %621 = dma.done [#allocation7], 256
        $region76: #{tpu_custom_call.1} parent=35 // pred_fallthru
          _
      $region36: #{tpu_custom_call.1} parent=5 // pred_fallthru
        _
      %p622 = scmp.le.s32.totalorder 2, %s22
      // Predicated region
      $region77: #{tpu_custom_call.1} parent=5 // pred_check
        %p623 = pneg %p622
      $region78: #{tpu_custom_call.1} parent=5 // pred_check_branch
        %625 = sbr.rel (%p623) target = $region80
      $region79: #{tpu_custom_call.1} parent=5 // pred_region
        %s626 = ssub.s32 %s22, 2
      $region80: #{tpu_custom_call.1} parent=5 // pred_fallthru
        _
    $region6: #{tpu_custom_call.1} parent=1 // loop_footer
      %s26 = sadd.s32 1, %s22
    $region7: #{tpu_custom_call.1} parent=1 // loop_footer_branch
      %21 = sbr.rel target = $region3
    $region8: #{tpu_custom_call.1} parent=1 // loop_exit
      _
    %627 = vsyncpa [#allocation6], 1
    %s628 = scalar_lea.sflag [#allocation6], 1
    %629 = vsyncpa %s628, 1
    %630 = vsyncpa [#allocation9], 1
    %s631 = scalar_lea.sflag [#allocation9], 1
    %632 = vsyncpa %s631, 1
    %633 = vsyncpa [#allocation7], 1
    %s634 = scalar_lea.sflag [#allocation7], 1
    %635 = vsyncpa %s634, 1

</llo_original>
